<compile_context>
chip_gen: v6e
topology: v6e:2x2x1
jax: 0.10.0
libtpu: 0.0.40
codegen_flags: <defaults>
</compile_context>

<pallas_src>
import jax
import jax.numpy as jnp
from jax.experimental import pallas as pl
from jax.experimental.pallas import tpu as pltpu


_GRAIN = 1024            # batch-row granularity: keeps x blocks (8,128)-aligned and
                         # the lane-dense output block a multiple of (8, 128)
_VMEM_BUDGET = 40 << 20  # target double-buffered working set (fits v7x 64 MiB/TC)
_VMEM_CAP = 48 << 20     # never request more scoped VMEM than this


def _round_up(n, m):
    return ((n + m - 1) // m) * m


def _fused_kernel_lane_dense(x_ref, w_ref, b_ref, o_ref):
    # x_ref: (tile_b // P, P*C)    packed batch rows (lane-dense input)
    # w_ref: (P*C, P)              block-diagonal replicated W_eff (VMEM resident)
    # b_ref: (1, 1)                fused scalar bias (SMEM)
    # o_ref: (tile_b // 128, 128)  lane-dense packed outputs (dense stores/writeback)
    z = jnp.dot(x_ref[...], w_ref[...], preferred_element_type=jnp.float32)
    y = jax.nn.sigmoid(z + b_ref[0, 0])
    # Row-major relayout (tile_b//P, P) -> (tile_b//128, 128); flat index == batch
    # index, so the wrapper's reshape(-1)[:B] is unchanged.  The XLU relayout of the
    # small result hides under the DMA-bound pipeline.
    o_ref[...] = y.reshape(o_ref.shape).astype(o_ref.dtype)


def _fused_kernel_narrow(x_ref, w_ref, b_ref, o_ref):
    # Fallback: P-lane-wide output block (previously validated layout).
    z = jnp.dot(x_ref[...], w_ref[...], preferred_element_type=jnp.float32)
    o_ref[...] = jax.nn.sigmoid(z + b_ref[0, 0]).astype(o_ref.dtype)


def _run_fused(x2, w_bd, b_eff, B_p, C, P, lane_dense, max_tile_rows):
    """Build + run the tiled pallas_call for one output layout variant."""
    # ---- batch tiling -------------------------------------------------------
    grains_total = int(pl.cdiv(B_p, _GRAIN))
    x_lanes = _round_up(P * C, 128)
    per_grain = 2 * (_GRAIN // P) * x_lanes * 4                               # x (x2 buffers)
    per_grain += 2 * (_GRAIN * 4 if lane_dense else (_GRAIN // P) * 128 * 4)  # out
    max_tg = max(1, min(max(max_tile_rows, _GRAIN) // _GRAIN,
                        _VMEM_BUDGET // per_grain))
    num_tiles = int(pl.cdiv(grains_total, max_tg))
    if grains_total >= 2:
        num_tiles = max(num_tiles, 2)          # v7x: give both TensorCores work
        if num_tiles % 2:
            num_tiles += 1                     # keep the tile count even
    num_tiles = min(num_tiles, grains_total)
    tile_grains = int(pl.cdiv(grains_total, num_tiles))
    tile_b = tile_grains * _GRAIN
    num_tiles = int(pl.cdiv(grains_total, tile_grains))

    # ---- VMEM accounting / compiler params ----------------------------------
    x_blk = (tile_b // P) * x_lanes * 4
    out_blk = tile_b * 4 if lane_dense else (tile_b // P) * 128 * 4
    w_blk = _round_up(P * C, 8) * 128 * 4
    need = 2 * x_blk + 2 * out_blk + 2 * w_blk + (1 << 20)
    vmem_limit = None
    if need > (14 << 20):        # beyond v5e's 16 MiB default scoped VMEM
        vmem_limit = int(min(_round_up(need + (2 << 20), 1 << 20), _VMEM_CAP))

    rows_proc = num_tiles * tile_b
    cost = pl.CostEstimate(
        flops=2 * (rows_proc // P) * (P * C) * P,
        transcendentals=rows_proc,
        bytes_accessed=B_p * C * 4 + rows_proc * 4 + P * C * P * 4,
    )

    if lane_dense:
        kernel = _fused_kernel_lane_dense
        out_shape = jax.ShapeDtypeStruct((rows_proc // 128, 128), jnp.float32)
        out_spec = pl.BlockSpec((tile_b // 128, 128), lambda i: (i, 0))
    else:
        kernel = _fused_kernel_narrow
        out_shape = jax.ShapeDtypeStruct((rows_proc // P, P), jnp.float32)
        out_spec = pl.BlockSpec((tile_b // P, P), lambda i: (i, 0))

    return pl.pallas_call(
        kernel,
        out_shape=out_shape,
        grid=(num_tiles,),
        in_specs=[
            pl.BlockSpec((tile_b // P, P * C), lambda i: (i, 0)),      # x tiles
            pl.BlockSpec((P * C, P), lambda i: (0, 0)),                # resident weight
            pl.BlockSpec((1, 1), lambda i: (0, 0),
                         memory_space=pltpu.MemorySpace.SMEM),         # scalar bias
        ],
        out_specs=out_spec,
        compiler_params=pltpu.CompilerParams(
            dimension_semantics=("parallel",),
            vmem_limit_bytes=vmem_limit),
        cost_estimate=cost,
    )(x2, w_bd, b_eff)


def predictor_forward(x, params, *, max_tile_rows=131072):
    """sigmoid(((x @ w1 + b1) @ w2 + b2) @ w3 + b3), fused into one Pallas kernel."""
    w1, b1, w2, b2, w3, b3 = params
    B, C = x.shape
    hp = jax.lax.Precision.HIGHEST

    # One-time algebraic fusion of the three Linear layers (no activation between
    # them).  f32 @ HIGHEST precision so the 1e-5 match vs. the layerwise reference
    # holds; do NOT insert a bf16 cast here (it adds an HBM pass and breaks 1e-5).
    w_eff = jnp.dot(jnp.dot(w1, w2, precision=hp), w3, precision=hp)             # (C, 1)
    b_eff = (jnp.dot(jnp.dot(b1, w2, precision=hp), w3, precision=hp)
             + jnp.dot(b2, w3, precision=hp) + b3)                               # (1, 1)
    b_eff = b_eff.reshape(1, 1).astype(jnp.float32)
    if x.dtype != jnp.float32:
        x = x.astype(jnp.float32)

    # Pack P batch rows per 128-lane row when C divides 128 (C=16 -> P=8).
    # NOTE: when 128 % C != 0 this degrades to P=1 (correct but lane-padded input).
    P = (128 // C) if (0 < C <= 128 and 128 % C == 0) else 1

    # Pad only when unavoidable: B not a multiple of P (rare; one extra copy of x)
    # or a tiny batch smaller than one grain.  Otherwise the packing reshape is a
    # free row-major bitcast and the ragged last tile uses partial-block reads.
    # TODO(synk): for huge B with B % P != 0, an aligned-prefix kernel + tiny JAX
    # epilogue would avoid this one extra HBM copy of x.
    B_p = _round_up(B, P)
    if B_p < _GRAIN:
        B_p = _GRAIN
    if B_p != B:
        x = jnp.pad(x, ((0, B_p - B), (0, 0)))
    x2 = x.reshape(B_p // P, P * C)                          # free row-major reshape
    # Block-diagonal replication of w_eff: w_bd[j*C + c, j] = w_eff[c].
    w_bd = jnp.kron(jnp.eye(P, dtype=w_eff.dtype), w_eff)    # (P*C, P)

    # Prefer the lane-dense (128-wide) output layout; if this Mosaic build cannot
    # lower the in-kernel (tile/P, P) -> (tile/128, 128) relayout, fall back to the
    # validated P-wide layout.  (Eager call => lowering errors are catchable here.)
    try:
        out = _run_fused(x2, w_bd, b_eff, B_p, C, P, True, max_tile_rows)
    except Exception:
        out = _run_fused(x2, w_bd, b_eff, B_p, C, P, False, max_tile_rows)

    # Row-major flatten index of the kernel output == batch index.
    return out.reshape(-1)[:B].reshape(B, 1)


def init_params(key, input_channels, n_units=32):
    """Deterministic init mimicking PyTorch nn.Linear default (uniform +-1/sqrt(fan_in))."""
    keys = jax.random.split(key, 6)

    def linear(kw, kb, fan_in, fan_out):
        bound = 1.0 / jnp.sqrt(fan_in)
        w = jax.random.uniform(kw, (fan_in, fan_out), jnp.float32, -bound, bound)
        b = jax.random.uniform(kb, (1, fan_out), jnp.float32, -bound, bound)
        return w, b

    w1, b1 = linear(keys[0], keys[1], input_channels, n_units)
    w2, b2 = linear(keys[2], keys[3], n_units, n_units)
    w3, b3 = linear(keys[4], keys[5], n_units, 1)
    return (w1, b1, w2, b2, w3, b3)


def predictor_reference(x, params):
    w1, b1, w2, b2, w3, b3 = params
    h = x @ w1 + b1
    h = h @ w2 + b2
    z = h @ w3 + b3
    return jax.nn.sigmoid(z)


if __name__ == "__main__":
    key = jax.random.PRNGKey(0)
    k_x, k_p = jax.random.split(key)

    batch = 8
    input_channels = 16
    n_units = 32

    x = jax.random.normal(k_x, (batch, input_channels), jnp.float32)
    params = init_params(k_p, input_channels, n_units)

    out = predictor_forward(x, params)
    out = jax.block_until_ready(out)

    ref = predictor_reference(x, params)
    assert out.shape == (batch, 1), out.shape
    assert jnp.allclose(out, ref, atol=1e-5, rtol=1e-5), (out, ref)

    print("KERNEL_OK")
</pallas_src>

<mosaic_0001>
module attributes {stable_mosaic.version = 11 : i64} {
  func.func @_fused_kernel_lane_dense(%arg0: i32, %arg1: memref<128x128xf32, #tpu.memory_space<vmem>>, %arg2: memref<128x8xf32, #tpu.memory_space<vmem>>, %arg3: memref<1x1xf32, #tpu.memory_space<smem>>, %arg4: memref<8x128xf32, #tpu.memory_space<vmem>>) attributes {dimension_semantics = [#tpu.dimension_semantics<parallel>], iteration_bounds = array<i64: 1>, scalar_prefetch = 0 : i64, scratch_operands = 0 : i64, tpu.core_type = #tpu.core_type<tc>, window_params = [{transform_indices = @transform_0, window_bounds = array<i64: 128, 128>}, {pipeline_mode = #tpu.pipeline_mode<synchronous>, transform_indices = @transform_1, window_bounds = array<i64: 128, 8>}, {transform_indices = @transform_2, window_bounds = array<i64: 1, 1>}, {transform_indices = @transform_3, window_bounds = array<i64: 8, 128>}]} {
    %c0 = arith.constant 0 : index
    %c0_0 = arith.constant 0 : index
    %0 = vector.load %arg1[%c0, %c0_0] : memref<128x128xf32, #tpu.memory_space<vmem>>, vector<128x128xf32>
    %c0_1 = arith.constant 0 : index
    %c0_2 = arith.constant 0 : index
    %1 = vector.load %arg2[%c0_1, %c0_2] : memref<128x8xf32, #tpu.memory_space<vmem>>, vector<128x8xf32>
    %cst = arith.constant dense<0.000000e+00> : vector<128x8xf32>
    %2 = tpu.matmul %0, %1, %cst {dimension_numbers = #tpu.dot_dimension_numbers<[1], [0], [0], [1], [0, 0, 1, 1], [], []>} : vector<128x128xf32>, vector<128x8xf32>, vector<128x8xf32> -> vector<128x8xf32>
    %c0_3 = arith.constant 0 : index
    %c0_4 = arith.constant 0 : index
    %3 = memref.load %arg3[%c0_3, %c0_4] : memref<1x1xf32, #tpu.memory_space<smem>>
    %4 = vector.broadcast %3 : f32 to vector<128x8xf32>
    %5 = arith.addf %2, %4 : vector<128x8xf32>
    %6 = arith.negf %5 : vector<128x8xf32>
    %7 = math.exp %6 : vector<128x8xf32>
    %cst_5 = arith.constant 1.000000e+00 : f32
    %8 = vector.broadcast %cst_5 : f32 to vector<128x8xf32>
    %9 = arith.addf %8, %7 : vector<128x8xf32>
    %10 = arith.divf %8, %9 : vector<128x8xf32>
    %11 = vector.shape_cast %10 : vector<128x8xf32> to vector<8x128xf32>
    %c0_6 = arith.constant 0 : index
    %c0_7 = arith.constant 0 : index
    %12 = vector.load %arg4[%c0_6, %c0_7] : memref<8x128xf32, #tpu.memory_space<vmem>>, vector<8x128xf32>
    tpu.vector_store %arg4[%c0_6, %c0_7], %11 {strides = array<i32>} : memref<8x128xf32, #tpu.memory_space<vmem>>, vector<8x128xf32>,
    return
  }
  func.func @transform_0(%arg0: i32) -> (i32, i32) {
    %c0_i32 = arith.constant 0 : i32
    %c0_i32_0 = arith.constant 0 : i32
    return %arg0, %c0_i32 : i32, i32
  }
  func.func @transform_1(%arg0: i32) -> (i32, i32) {
    %c0_i32 = arith.constant 0 : i32
    %c0_i32_0 = arith.constant 0 : i32
    %c0_i32_1 = arith.constant 0 : i32
    return %c0_i32, %c0_i32_0 : i32, i32
  }
  func.func @transform_2(%arg0: i32) -> (i32, i32) {
    %c0_i32 = arith.constant 0 : i32
    %c0_i32_0 = arith.constant 0 : i32
    %c0_i32_1 = arith.constant 0 : i32
    return %c0_i32, %c0_i32_0 : i32, i32
  }
  func.func @transform_3(%arg0: i32) -> (i32, i32) {
    %c0_i32 = arith.constant 0 : i32
    %c0_i32_0 = arith.constant 0 : i32
    return %arg0, %c0_i32 : i32, i32
  }
}

module attributes {stable_mosaic.version = 11 : i64} {
  func.func @_fused_kernel_narrow(%arg0: i32, %arg1: memref<128x128xf32, #tpu.memory_space<vmem>>, %arg2: memref<128x8xf32, #tpu.memory_space<vmem>>, %arg3: memref<1x1xf32, #tpu.memory_space<smem>>, %arg4: memref<128x8xf32, #tpu.memory_space<vmem>>) attributes {dimension_semantics = [#tpu.dimension_semantics<parallel>], iteration_bounds = array<i64: 1>, scalar_prefetch = 0 : i64, scratch_operands = 0 : i64, tpu.core_type = #tpu.core_type<tc>, window_params = [{transform_indices = @transform_0, window_bounds = array<i64: 128, 128>}, {pipeline_mode = #tpu.pipeline_mode<synchronous>, transform_indices = @transform_1, window_bounds = array<i64: 128, 8>}, {transform_indices = @transform_2, window_bounds = array<i64: 1, 1>}, {transform_indices = @transform_3, window_bounds = array<i64: 128, 8>}]} {
    %c0 = arith.constant 0 : index
    %c0_0 = arith.constant 0 : index
    %0 = vector.load %arg1[%c0, %c0_0] : memref<128x128xf32, #tpu.memory_space<vmem>>, vector<128x128xf32>
    %c0_1 = arith.constant 0 : index
    %c0_2 = arith.constant 0 : index
    %1 = vector.load %arg2[%c0_1, %c0_2] : memref<128x8xf32, #tpu.memory_space<vmem>>, vector<128x8xf32>
    %cst = arith.constant dense<0.000000e+00> : vector<128x8xf32>
    %2 = tpu.matmul %0, %1, %cst {dimension_numbers = #tpu.dot_dimension_numbers<[1], [0], [0], [1], [0, 0, 1, 1], [], []>} : vector<128x128xf32>, vector<128x8xf32>, vector<128x8xf32> -> vector<128x8xf32>
    %c0_3 = arith.constant 0 : index
    %c0_4 = arith.constant 0 : index
    %3 = memref.load %arg3[%c0_3, %c0_4] : memref<1x1xf32, #tpu.memory_space<smem>>
    %4 = vector.broadcast %3 : f32 to vector<128x8xf32>
    %5 = arith.addf %2, %4 : vector<128x8xf32>
    %6 = arith.negf %5 : vector<128x8xf32>
    %7 = math.exp %6 : vector<128x8xf32>
    %cst_5 = arith.constant 1.000000e+00 : f32
    %8 = vector.broadcast %cst_5 : f32 to vector<128x8xf32>
    %9 = arith.addf %8, %7 : vector<128x8xf32>
    %10 = arith.divf %8, %9 : vector<128x8xf32>
    %c0_6 = arith.constant 0 : index
    %c0_7 = arith.constant 0 : index
    %11 = vector.load %arg4[%c0_6, %c0_7] : memref<128x8xf32, #tpu.memory_space<vmem>>, vector<128x8xf32>
    tpu.vector_store %arg4[%c0_6, %c0_7], %10 {strides = array<i32>} : memref<128x8xf32, #tpu.memory_space<vmem>>, vector<128x8xf32>,
    return
  }
  func.func @transform_0(%arg0: i32) -> (i32, i32) {
    %c0_i32 = arith.constant 0 : i32
    %c0_i32_0 = arith.constant 0 : i32
    return %arg0, %c0_i32 : i32, i32
  }
  func.func @transform_1(%arg0: i32) -> (i32, i32) {
    %c0_i32 = arith.constant 0 : i32
    %c0_i32_0 = arith.constant 0 : i32
    %c0_i32_1 = arith.constant 0 : i32
    return %c0_i32, %c0_i32_0 : i32, i32
  }
  func.func @transform_2(%arg0: i32) -> (i32, i32) {
    %c0_i32 = arith.constant 0 : i32
    %c0_i32_0 = arith.constant 0 : i32
    %c0_i32_1 = arith.constant 0 : i32
    return %c0_i32, %c0_i32_0 : i32, i32
  }
  func.func @transform_3(%arg0: i32) -> (i32, i32) {
    %c0_i32 = arith.constant 0 : i32
    %c0_i32_0 = arith.constant 0 : i32
    return %arg0, %c0_i32 : i32, i32
  }
}

</mosaic_0001>

<llo_original>
// kernel: tpu_custom_call.1
$region0: #{tpu_custom_call.1}
  #allocation0 [shape = 'u32[]', space=smem, size = 0x4, offset = 0x4, fixed_abs, tag = 'smem constant byte address 0x4 - core index']
  #allocation1 [shape = 'u32[144,128]{1,0:T(1,128)}', space=vmem, size = 0x12000, scoped, tag = 'internal scratch']
  #allocation2 [shape = 'f32[1,1]{1,0:T(1,128)S(6)}', space=smem, size = 0x200, scoped, tag = 'scoped memory for tpu_custom_call.1']
  %s0 = inlined_call_operand.vmem [shape: f32[128,128], index: 0, kind: input, shape index: {}]
  %s1 = inlined_call_operand.vmem [shape: f32[128,8], index: 1, kind: input, shape index: {}]
  %s2 = inlined_call_operand.<no memory space> [shape: f32[1,1], index: 2, kind: input, shape index: {}]
  %s3 = inlined_call_operand.vmem [shape: f32[128,8], index: 3, kind: output, shape index: {}]
  %s4 = sld [smem:[#allocation0]]
  $region22: #{tpu_custom_call.1} parent=0
    _
  %s6 = ssub.s32 1, %s4
  %s7 = scalar_select 0, %s6, %s4
  %8 = sst [smem:[#allocation2]] %s2
  // Predicated region
  $region2: #{tpu_custom_call.1} parent=0 // pred_check
    _
  $region3: #{tpu_custom_call.1} parent=0 // pred_check_branch
    %10 = sbr.rel (0) target = $region5
  $region4: #{tpu_custom_call.1} parent=0 // pred_region
    _
  $region5: #{tpu_custom_call.1} parent=0 // pred_fallthru
    _
  // Predicated region
  $region6: #{tpu_custom_call.1} parent=0 // pred_check
    _
  $region7: #{tpu_custom_call.1} parent=0 // pred_check_branch
    %12 = sbr.rel (0) target = $region9
  $region8: #{tpu_custom_call.1} parent=0 // pred_region
    _
  $region9: #{tpu_custom_call.1} parent=0 // pred_fallthru
    _
  // Predicated region
  $region10: #{tpu_custom_call.1} parent=0 // pred_check
    _
  $region11: #{tpu_custom_call.1} parent=0 // pred_check_branch
    %14 = sbr.rel (0) target = $region13
  $region12: #{tpu_custom_call.1} parent=0 // pred_region
    _
  $region13: #{tpu_custom_call.1} parent=0 // pred_fallthru
    _
  %v15 = vld [vmem:[%s0] sm:$0xff]
  %v16 = vld [vmem:[%s0 + $0x8] sm:$0xff]
  %v17 = vld [vmem:[%s0 + $0x10] sm:$0xff]
  %v18 = vld [vmem:[%s0 + $0x18] sm:$0xff]
  %v19 = vld [vmem:[%s0 + $0x20] sm:$0xff]
  %v20 = vld [vmem:[%s0 + $0x28] sm:$0xff]
  %v21 = vld [vmem:[%s0 + $0x30] sm:$0xff]
  %v22 = vld [vmem:[%s0 + $0x38] sm:$0xff]
  %v23 = vld [vmem:[%s0 + $0x40] sm:$0xff]
  %v24 = vld [vmem:[%s0 + $0x48] sm:$0xff]
  %v25 = vld [vmem:[%s0 + $0x50] sm:$0xff]
  %v26 = vld [vmem:[%s0 + $0x58] sm:$0xff]
  %v27 = vld [vmem:[%s0 + $0x60] sm:$0xff]
  %v28 = vld [vmem:[%s0 + $0x68] sm:$0xff]
  %v29 = vld [vmem:[%s0 + $0x70] sm:$0xff]
  %v30 = vld [vmem:[%s0 + $0x78] sm:$0xff]
  %v31 = vld [vmem:[%s1] sm:$0xff]
  %v32 = vld [vmem:[%s1 + $0x8] sm:$0xff]
  %v33 = vld [vmem:[%s1 + $0x10] sm:$0xff]
  %v34 = vld [vmem:[%s1 + $0x18] sm:$0xff]
  %v35 = vld [vmem:[%s1 + $0x20] sm:$0xff]
  %v36 = vld [vmem:[%s1 + $0x28] sm:$0xff]
  %v37 = vld [vmem:[%s1 + $0x30] sm:$0xff]
  %v38 = vld [vmem:[%s1 + $0x38] sm:$0xff]
  %v39 = vld [vmem:[%s1 + $0x40] sm:$0xff]
  %v40 = vld [vmem:[%s1 + $0x48] sm:$0xff]
  %v41 = vld [vmem:[%s1 + $0x50] sm:$0xff]
  %v42 = vld [vmem:[%s1 + $0x58] sm:$0xff]
  %v43 = vld [vmem:[%s1 + $0x60] sm:$0xff]
  %v44 = vld [vmem:[%s1 + $0x68] sm:$0xff]
  %v45 = vld [vmem:[%s1 + $0x70] sm:$0xff]
  %v46 = vld [vmem:[%s1 + $0x78] sm:$0xff]
  %s47 = sld [smem:[#allocation2]]
  %v48 = vstv %s47
  %49 = vmatprep.subr.mxu0 0.0
  %50 = vmatpush1.msra.mxu0 %v46
  %51 = vmatprep.subr.mxu0 0.0
  %52 = vmatpush1.msra.mxu0 %v45
  %53 = vmatprep.subr.mxu0 0.0
  %54 = vmatpush1.msra.mxu0 %v44
  %55 = vmatprep.subr.mxu0 0.0
  %56 = vmatpush1.msra.mxu0 %v43
  %57 = vmatprep.subr.mxu0 0.0
  %58 = vmatpush1.msra.mxu0 %v42
  %59 = vmatprep.subr.mxu0 0.0
  %60 = vmatpush1.msra.mxu0 %v41
  %61 = vmatprep.subr.mxu0 0.0
  %62 = vmatpush1.msra.mxu0 %v40
  %63 = vmatprep.subr.mxu0 0.0
  %64 = vmatpush1.msra.mxu0 %v39
  %65 = vmatprep.subr.mxu0 0.0
  %66 = vmatpush1.msra.mxu0 %v38
  %67 = vmatprep.subr.mxu0 0.0
  %68 = vmatpush1.msra.mxu0 %v37
  %69 = vmatprep.subr.mxu0 0.0
  %70 = vmatpush1.msra.mxu0 %v36
  %71 = vmatprep.subr.mxu0 0.0
  %72 = vmatpush1.msra.mxu0 %v35
  %73 = vmatprep.subr.mxu0 0.0
  %74 = vmatpush1.msra.mxu0 %v34
  %75 = vmatprep.subr.mxu0 0.0
  %76 = vmatpush1.msra.mxu0 %v33
  %77 = vmatprep.subr.mxu0 0.0
  %78 = vmatpush1.msra.mxu0 %v32
  %79 = vmatprep.subr.mxu0 0.0
  %80 = vmatpush1.msra.mxu0 %v31
  %81 = vmatprep.subr.mxu0 0.0
  %82 = vmatpush2.msra.mxu0 0.0
  %83 = vmatprep.subr.mxu0 0.0
  %84 = vmatpush2.msra.mxu0 0.0
  %85 = vmatprep.subr.mxu0 0.0
  %86 = vmatpush2.msra.mxu0 0.0
  %87 = vmatprep.subr.mxu0 0.0
  %88 = vmatpush2.msra.mxu0 0.0
  %89 = vmatprep.subr.mxu0 0.0
  %90 = vmatpush2.msra.mxu0 0.0
  %91 = vmatprep.subr.mxu0 0.0
  %92 = vmatpush2.msra.mxu0 0.0
  %93 = vmatprep.subr.mxu0 0.0
  %94 = vmatpush2.msra.mxu0 0.0
  %95 = vmatprep.subr.mxu0 0.0
  %96 = vmatpush2.msra.mxu0 0.0
  %97 = vmatprep.subr.mxu0 0.0
  %98 = vmatpush2.msra.mxu0 0.0
  %99 = vmatprep.subr.mxu0 0.0
  %100 = vmatpush2.msra.mxu0 0.0
  %101 = vmatprep.subr.mxu0 0.0
  %102 = vmatpush2.msra.mxu0 0.0
  %103 = vmatprep.subr.mxu0 0.0
  %104 = vmatpush2.msra.mxu0 0.0
  %105 = vmatprep.subr.mxu0 0.0
  %106 = vmatpush2.msra.mxu0 0.0
  %107 = vmatprep.subr.mxu0 0.0
  %108 = vmatpush2.msra.mxu0 0.0
  %109 = vmatprep.subr.mxu0 0.0
  %110 = vmatpush2.msra.mxu0 0.0
  %111 = vmatprep.subr.mxu0 0.0
  %112 = vmatpush2.msra.mxu0 0.0
  %113 = vmatprep.mubr.f32.mxu0 0.0
  %114 = vmatmul.mubr.f32.gmra.mxu0 %v15
  %v115 = vpop.f32.mrf.mxu0
  %v116 = vadd.f32 %v48, %v115
  %v117 = vpop.f32.mrf.mxu0
  %118 = vmatprep.mubr.f32.mxu0 0.0
  %119 = vmatmul.mubr.f32.gmra.mxu0 %v16
  %v120 = vpop.f32.mrf.mxu0
  %v121 = vadd.f32 %v48, %v120
  %v122 = vpop.f32.mrf.mxu0
  %123 = vmatprep.mubr.f32.mxu0 0.0
  %124 = vmatmul.mubr.f32.gmra.mxu0 %v17
  %v125 = vpop.f32.mrf.mxu0
  %v126 = vadd.f32 %v48, %v125
  %v127 = vpop.f32.mrf.mxu0
  %128 = vmatprep.mubr.f32.mxu0 0.0
  %129 = vmatmul.mubr.f32.gmra.mxu0 %v18
  %v130 = vpop.f32.mrf.mxu0
  %v131 = vadd.f32 %v48, %v130
  %v132 = vpop.f32.mrf.mxu0
  %133 = vmatprep.mubr.f32.mxu0 0.0
  %134 = vmatmul.mubr.f32.gmra.mxu0 %v19
  %v135 = vpop.f32.mrf.mxu0
  %v136 = vadd.f32 %v48, %v135
  %v137 = vpop.f32.mrf.mxu0
  %138 = vmatprep.mubr.f32.mxu0 0.0
  %139 = vmatmul.mubr.f32.gmra.mxu0 %v20
  %v140 = vpop.f32.mrf.mxu0
  %v141 = vadd.f32 %v48, %v140
  %v142 = vpop.f32.mrf.mxu0
  %143 = vmatprep.mubr.f32.mxu0 0.0
  %144 = vmatmul.mubr.f32.gmra.mxu0 %v21
  %v145 = vpop.f32.mrf.mxu0
  %v146 = vadd.f32 %v48, %v145
  %v147 = vpop.f32.mrf.mxu0
  %148 = vmatprep.mubr.f32.mxu0 0.0
  %149 = vmatmul.mubr.f32.gmra.mxu0 %v22
  %v150 = vpop.f32.mrf.mxu0
  %v151 = vadd.f32 %v48, %v150
  %v152 = vpop.f32.mrf.mxu0
  %153 = vmatprep.mubr.f32.mxu0 0.0
  %154 = vmatmul.mubr.f32.gmra.mxu0 %v23
  %v155 = vpop.f32.mrf.mxu0
  %v156 = vadd.f32 %v48, %v155
  %v157 = vpop.f32.mrf.mxu0
  %158 = vmatprep.mubr.f32.mxu0 0.0
  %159 = vmatmul.mubr.f32.gmra.mxu0 %v24
  %v160 = vpop.f32.mrf.mxu0
  %v161 = vadd.f32 %v48, %v160
  %v162 = vpop.f32.mrf.mxu0
  %163 = vmatprep.mubr.f32.mxu0 0.0
  %164 = vmatmul.mubr.f32.gmra.mxu0 %v25
  %v165 = vpop.f32.mrf.mxu0
  %v166 = vadd.f32 %v48, %v165
  %v167 = vpop.f32.mrf.mxu0
  %168 = vmatprep.mubr.f32.mxu0 0.0
  %169 = vmatmul.mubr.f32.gmra.mxu0 %v26
  %v170 = vpop.f32.mrf.mxu0
  %v171 = vadd.f32 %v48, %v170
  %v172 = vpop.f32.mrf.mxu0
  %173 = vmatprep.mubr.f32.mxu0 0.0
  %174 = vmatmul.mubr.f32.gmra.mxu0 %v27
  %v175 = vpop.f32.mrf.mxu0
  %v176 = vadd.f32 %v48, %v175
  %v177 = vpop.f32.mrf.mxu0
  %178 = vmatprep.mubr.f32.mxu0 0.0
  %179 = vmatmul.mubr.f32.gmra.mxu0 %v28
  %v180 = vpop.f32.mrf.mxu0
  %v181 = vadd.f32 %v48, %v180
  %v182 = vpop.f32.mrf.mxu0
  %183 = vmatprep.mubr.f32.mxu0 0.0
  %184 = vmatmul.mubr.f32.gmra.mxu0 %v29
  %v185 = vpop.f32.mrf.mxu0
  %v186 = vadd.f32 %v48, %v185
  %v187 = vpop.f32.mrf.mxu0
  %188 = vmatprep.mubr.f32.mxu0 0.0
  %189 = vmatmul.mubr.f32.gmra.mxu0 %v30
  %v190 = vpop.f32.mrf.mxu0
  %v191 = vadd.f32 %v48, %v190
  %v192 = vpop.f32.mrf.mxu0
  %193 = vdwg.mxu0
  %v194 = vxor.u32 %v116, 2147483648
  %v195 = vxor.u32 %v121, 2147483648
  %v196 = vxor.u32 %v126, 2147483648
  %v197 = vxor.u32 %v131, 2147483648
  %v198 = vxor.u32 %v136, 2147483648
  %v199 = vxor.u32 %v141, 2147483648
  %v200 = vxor.u32 %v146, 2147483648
  %v201 = vxor.u32 %v151, 2147483648
  %v202 = vxor.u32 %v156, 2147483648
  %v203 = vxor.u32 %v161, 2147483648
  %v204 = vxor.u32 %v166, 2147483648
  %v205 = vxor.u32 %v171, 2147483648
  %v206 = vxor.u32 %v176, 2147483648
  %v207 = vxor.u32 %v181, 2147483648
  %v208 = vxor.u32 %v186, 2147483648
  %v209 = vxor.u32 %v191, 2147483648
  %v210 = vmul.f32 %v194, 1.442695
  %v211 = vpow.pop %v210
  %v212 = vmul.f32 %v195, 1.442695
  %v213 = vpow.pop %v212
  %v214 = vmul.f32 %v196, 1.442695
  %v215 = vpow.pop %v214
  %v216 = vmul.f32 %v197, 1.442695
  %v217 = vpow.pop %v216
  %v218 = vmul.f32 %v198, 1.442695
  %v219 = vpow.pop %v218
  %v220 = vmul.f32 %v199, 1.442695
  %v221 = vpow.pop %v220
  %v222 = vmul.f32 %v200, 1.442695
  %v223 = vpow.pop %v222
  %v224 = vmul.f32 %v201, 1.442695
  %v225 = vpow.pop %v224
  %v226 = vmul.f32 %v202, 1.442695
  %v227 = vpow.pop %v226
  %v228 = vmul.f32 %v203, 1.442695
  %v229 = vpow.pop %v228
  %v230 = vmul.f32 %v204, 1.442695
  %v231 = vpow.pop %v230
  %v232 = vmul.f32 %v205, 1.442695
  %v233 = vpow.pop %v232
  %v234 = vmul.f32 %v206, 1.442695
  %v235 = vpow.pop %v234
  %v236 = vmul.f32 %v207, 1.442695
  %v237 = vpow.pop %v236
  %v238 = vmul.f32 %v208, 1.442695
  %v239 = vpow.pop %v238
  %v240 = vmul.f32 %v209, 1.442695
  %v241 = vpow.pop %v240
  %v242 = vadd.f32 %v211, 1.0
  %v243 = vadd.f32 %v213, 1.0
  %v244 = vadd.f32 %v215, 1.0
  %v245 = vadd.f32 %v217, 1.0
  %v246 = vadd.f32 %v219, 1.0
  %v247 = vadd.f32 %v221, 1.0
  %v248 = vadd.f32 %v223, 1.0
  %v249 = vadd.f32 %v225, 1.0
  %v250 = vadd.f32 %v227, 1.0
  %v251 = vadd.f32 %v229, 1.0
  %v252 = vadd.f32 %v231, 1.0
  %v253 = vadd.f32 %v233, 1.0
  %v254 = vadd.f32 %v235, 1.0
  %v255 = vadd.f32 %v237, 1.0
  %v256 = vadd.f32 %v239, 1.0
  %v257 = vadd.f32 %v241, 1.0
  %v258 = vrcp.pop %v242
  %v259 = vmul.f32 1.0, %v258
  %v260 = vrcp.pop %v243
  %v261 = vmul.f32 1.0, %v260
  %v262 = vrcp.pop %v244
  %v263 = vmul.f32 1.0, %v262
  %v264 = vrcp.pop %v245
  %v265 = vmul.f32 1.0, %v264
  %v266 = vrcp.pop %v246
  %v267 = vmul.f32 1.0, %v266
  %v268 = vrcp.pop %v247
  %v269 = vmul.f32 1.0, %v268
  %v270 = vrcp.pop %v248
  %v271 = vmul.f32 1.0, %v270
  %v272 = vrcp.pop %v249
  %v273 = vmul.f32 1.0, %v272
  %v274 = vrcp.pop %v250
  %v275 = vmul.f32 1.0, %v274
  %v276 = vrcp.pop %v251
  %v277 = vmul.f32 1.0, %v276
  %v278 = vrcp.pop %v252
  %v279 = vmul.f32 1.0, %v278
  %v280 = vrcp.pop %v253
  %v281 = vmul.f32 1.0, %v280
  %v282 = vrcp.pop %v254
  %v283 = vmul.f32 1.0, %v282
  %v284 = vrcp.pop %v255
  %v285 = vmul.f32 1.0, %v284
  %v286 = vrcp.pop %v256
  %v287 = vmul.f32 1.0, %v286
  %v288 = vrcp.pop %v257
  %v289 = vmul.f32 1.0, %v288
  %vm290 = vcmask 64512
  %291 = vst.msk [vmem:[%s3] sm:$0xff] %vm290, %v259
  %292 = vst.msk [vmem:[%s3 + $0x8] sm:$0xff] %vm290, %v261
  %293 = vst.msk [vmem:[%s3 + $0x10] sm:$0xff] %vm290, %v263
  %294 = vst.msk [vmem:[%s3 + $0x18] sm:$0xff] %vm290, %v265
  %295 = vst.msk [vmem:[%s3 + $0x20] sm:$0xff] %vm290, %v267
  %296 = vst.msk [vmem:[%s3 + $0x28] sm:$0xff] %vm290, %v269
  %297 = vst.msk [vmem:[%s3 + $0x30] sm:$0xff] %vm290, %v271
  %298 = vst.msk [vmem:[%s3 + $0x38] sm:$0xff] %vm290, %v273
  %299 = vst.msk [vmem:[%s3 + $0x40] sm:$0xff] %vm290, %v275
  %300 = vst.msk [vmem:[%s3 + $0x48] sm:$0xff] %vm290, %v277
  %301 = vst.msk [vmem:[%s3 + $0x50] sm:$0xff] %vm290, %v279
  %302 = vst.msk [vmem:[%s3 + $0x58] sm:$0xff] %vm290, %v281
  %303 = vst.msk [vmem:[%s3 + $0x60] sm:$0xff] %vm290, %v283
  %304 = vst.msk [vmem:[%s3 + $0x68] sm:$0xff] %vm290, %v285
  %305 = vst.msk [vmem:[%s3 + $0x70] sm:$0xff] %vm290, %v287
  %306 = vst.msk [vmem:[%s3 + $0x78] sm:$0xff] %vm290, %v289
  // Predicated region
  $region14: #{tpu_custom_call.1} parent=0 // pred_check
    _
  $region15: #{tpu_custom_call.1} parent=0 // pred_check_branch
    %308 = sbr.rel (0) target = $region17
  $region16: #{tpu_custom_call.1} parent=0 // pred_region
    _
  $region17: #{tpu_custom_call.1} parent=0 // pred_fallthru
    _
  // Predicated region
  $region18: #{tpu_custom_call.1} parent=0 // pred_check
    _
  $region19: #{tpu_custom_call.1} parent=0 // pred_check_branch
    %310 = sbr.rel (0) target = $region21
  $region20: #{tpu_custom_call.1} parent=0 // pred_region
    _
  $region21: #{tpu_custom_call.1} parent=0 // pred_fallthru
    _

</llo_original>
